<compile_context>
chip_gen: v7x
topology: tpu7x:2x2x1
jax: 0.10.0
libtpu: 0.0.40
codegen_flags: <defaults>
</compile_context>

<pallas_src>
import functools

import jax
import jax.numpy as jnp
import numpy as np
from jax import lax
from jax.experimental import pallas as pl
from jax.experimental.pallas import tpu as pltpu

LANES = 128
MAX_BLOCK_ROWS = 8192              # 4 MiB f32 per input block
VMEM_LIMIT_BYTES = 48 * 1024 * 1024


def _cdiv(a, b):
    return -(-a // b)


def _round_up(x, m):
    return ((x + m - 1) // m) * m


def _corr_stats_kernel(o_ref, l_ref, g_ref, stats_ref, *, n, block_rows, eq_odd):
    """Accumulate (8,128)-slab partial sums over one (block_rows, 128) tile.

    stats layout per parallel split (each statistic = one f32 vreg of 8 rows):
      EqOdd : [cnt_all, So_all, Sg_all, Sog_all, Soo_all, Sgg_all,
               cnt_1,   So_1,   Sg_1,   Sog_1,   Soo_1,   Sgg_1 ]   (96 rows)
      EqOpp : [cnt_0,   So_0,   Sg_0,   Sog_0,   Soo_0,   Sgg_0 ]   (48 rows)
    Label-0 stats for EqOdd are recovered in the epilogue as (all - label1);
    this assumes real labels take values in {0, 1} (the values torch iterates).
    """
    k = pl.program_id(1)

    @pl.when(k == 0)
    def _init():
        stats_ref[...] = jnp.zeros_like(stats_ref)

    steps = pl.num_programs(1)
    block_elems = block_rows * LANES
    block_idx = pl.program_id(0) * steps + k        # UNclamped logical block id
    base = block_idx * block_elems                  # first sample index of block
    is_real = base < n                              # block overlaps the data
    is_full = (base + block_elems) <= n             # block is 100% valid samples

    def slab(t):
        # (block_rows, 128) -> (8, 128): vreg adds only, no cross-sublane work.
        return t.reshape(block_rows // 8, 8, LANES).sum(axis=0)

    def accumulate(masked):
        x = o_ref[...].astype(jnp.float32)
        grp = g_ref[...].astype(jnp.float32)
        lab = l_ref[...]

        if masked:
            rid = lax.broadcasted_iota(jnp.int32, (block_rows, LANES), 0)
            lid = lax.broadcasted_iota(jnp.int32, (block_rows, LANES), 1)
            valid = (base + rid * LANES + lid) < n
            valid_f = valid.astype(jnp.float32)
            # select (not multiply): past-the-array block tails may hold NaN garbage
            x = jnp.where(valid, x, 0.0)
            grp = jnp.where(valid, grp, 0.0)

        # numerically stable log-sigmoid (matches torch.nn.LogSigmoid)
        ls = jnp.minimum(x, 0.0) - jnp.log(1.0 + jnp.exp(-jnp.abs(x)))
        og = ls * grp
        oo = ls * ls
        gg = grp * grp

        slabs = []
        if eq_odd:
            # bucket "all valid samples" — completely unmasked on full blocks.
            if masked:
                # grp/og/gg are already zeroed at invalid positions via the where.
                slabs += [slab(valid_f), slab(valid_f * ls), slab(grp),
                          slab(og), slab(valid_f * oo), slab(gg)]
            else:
                slabs += [jnp.full((8, LANES), float(block_rows // 8), jnp.float32),
                          slab(ls), slab(grp), slab(og), slab(oo), slab(gg)]
            mask_labels = (1,)
        else:
            mask_labels = (0,)

        for lv in mask_labels:                       # static python loop (1 label)
            m = (lab == lv).astype(jnp.float32)
            if masked:
                m = m * valid_f
            slabs += [slab(m), slab(m * ls), slab(m * grp),
                      slab(m * og), slab(m * oo), slab(m * gg)]

        # vreg-aligned RMW on the resident accumulator (static slices).
        for j, s in enumerate(slabs):
            stats_ref[j * 8:(j + 1) * 8, :] += s

    @pl.when(jnp.logical_and(is_real, is_full))
    def _bulk():
        accumulate(masked=False)

    @pl.when(jnp.logical_and(is_real, jnp.logical_not(is_full)))
    def _tail():
        accumulate(masked=True)


def _tile_safe(a, block_rows):
    """Keep the incoming dtype (no extra HBM pass) unless its TPU sublane-tile
    requirement is incompatible with the chosen block height (or it is 64-bit)."""
    if a.dtype == jnp.bool_:
        a = a.astype(jnp.int8)
    itemsize = np.dtype(a.dtype).itemsize
    min_rows = {1: 32, 2: 16, 4: 8}.get(itemsize, 8)
    if itemsize == 8 or block_rows % min_rows != 0:
        a = a.astype(jnp.float32 if jnp.issubdtype(a.dtype, jnp.floating)
                     else jnp.int32)
    return a


def corr_loss(outputs, labels, group, fair_criteria="EqOdd"):
    """Pallas-TPU equivalent of CorrLoss(device, fair_criteria)(outputs, labels, group)."""
    assert fair_criteria in ("EqOdd", "EqOpp")
    eq_odd = fair_criteria == "EqOdd"
    num_buckets = 2 if eq_odd else 1
    stat_rows = num_buckets * 6 * 8

    outputs = outputs.reshape(-1)
    labels = labels.reshape(-1)
    group = group.reshape(-1)
    n = int(outputs.shape[0])

    # --- grid sizing ----------------------------------------------------------
    rows = _cdiv(n, LANES)                        # 128-wide rows of samples
    n_split = 2 if rows >= 16 else 1              # >=2 vreg-rows of work -> both v7x cores
    rows_per_split = _cdiv(rows, n_split)
    block_rows = min(MAX_BLOCK_ROWS, _round_up(rows_per_split, 8))
    steps = _cdiv(rows_per_split, block_rows)     # reduction steps per split
    real_blocks = _cdiv(rows, block_rows)         # blocks that actually touch data

    # --- present the flat arrays as (rows, 128) without a full-array copy ------
    # reshape is free when n % 128 == 0; otherwise pad to the next 128 multiple.
    # TODO(synk): that remaining pad is still one HBM copy per array; a
    # memory_space=pl.ANY manual-DMA tail path would remove it as well.
    arr_rows = max(rows, block_rows)              # tiny inputs: block must fit the array
    pad = arr_rows * LANES - n

    def to2d(a):
        a = _tile_safe(a, block_rows)
        if pad:
            a = jnp.pad(a, (0, pad))
        return a.reshape(arr_rows, LANES)

    o2, l2, g2 = to2d(outputs), to2d(labels), to2d(group)

    def idx_map(c, k):
        # A trailing over-cover block re-reads the last real block (cheap);
        # its contribution is skipped in-kernel via the `is_real` gate.
        return (jnp.minimum(c * steps + k, real_blocks - 1), 0)

    kernel = functools.partial(_corr_stats_kernel, n=n, block_rows=block_rows,
                               eq_odd=eq_odd)

    stats = pl.pallas_call(
        kernel,
        out_shape=jax.ShapeDtypeStruct((n_split * stat_rows, LANES), jnp.float32),
        grid_spec=pltpu.PrefetchScalarGridSpec(
            num_scalar_prefetch=0,
            grid=(n_split, steps),
            in_specs=[pl.BlockSpec((block_rows, LANES), idx_map)] * 3,
            # one resident accumulator block per parallel split
            out_specs=pl.BlockSpec((stat_rows, LANES), lambda c, k: (c, 0)),
        ),
        compiler_params=pltpu.CompilerParams(
            dimension_semantics=("parallel", "arbitrary"),
            vmem_limit_bytes=VMEM_LIMIT_BYTES),
    )(o2, l2, g2)

    # --- epilogue: fold splits / sublanes / lanes, then scalar corr math -------
    sums = stats.reshape(n_split, num_buckets, 6, 8, LANES).sum(axis=(0, 3, 4))
    if eq_odd:
        buckets = [sums[0] - sums[1], sums[1]]    # label 0 (derived), label 1
    else:
        buckets = [sums[0]]                       # label 0

    total = jnp.zeros((1,), jnp.float32)
    for b in buckets:
        cnt, s_o, s_g, s_og, s_oo, s_gg = (b[i] for i in range(6))
        safe_cnt = jnp.maximum(cnt, 1.0)
        mean_o = s_o / safe_cnt
        mean_g = s_g / safe_cnt
        numerator = s_og / safe_cnt - mean_o * mean_g
        # torch .std() is unbiased (ddof=1); cnt<=1 is guarded to 0 here
        # (torch would produce NaN for a single-sample label).
        var_o = jnp.maximum(s_oo - safe_cnt * mean_o * mean_o, 0.0) / jnp.maximum(cnt - 1.0, 1.0)
        var_g = jnp.maximum(s_gg - safe_cnt * mean_g * mean_g, 0.0) / jnp.maximum(cnt - 1.0, 1.0)
        corr = jnp.abs(numerator / (jnp.sqrt(var_o) * jnp.sqrt(var_g) + 1e-6))
        # zero-count labels contribute 0 (torch prints "Skipping ..." and adds 0)
        total = total + jnp.where(cnt > 0.0, corr, 0.0)
    return total


if __name__ == "__main__":
    key = jax.random.PRNGKey(0)

    def reference(outputs, labels, group, crit):
        o_np = np.asarray(outputs, dtype=np.float64)
        l_np = np.asarray(labels)
        g_np = np.asarray(group, dtype=np.float64)
        ls_np = np.minimum(o_np, 0.0) - np.log1p(np.exp(-np.abs(o_np)))
        ref = 0.0
        for lv in ((0, 1) if crit == "EqOdd" else (0,)):
            msk = l_np == lv
            if msk.sum() > 0:
                oo, gg = ls_np[msk], g_np[msk]
                num = (oo * gg).mean() - oo.mean() * gg.mean()
                den = oo.std(ddof=1) * gg.std(ddof=1)
                ref += abs(num / (den + 1e-6))
        return ref

    # N=200      : single partial block (masked path only).
    # N=4096     : n % 128 == 0 (copy-free reshape), 2-way split, all-full blocks.
    # N=6181     : 2-way split with a masked tail block and a 128-pad.
    # N=2200000  : MAX_BLOCK_ROWS blocks, multi-step reduction, and one clamped
    #              over-cover block that must be skipped in-kernel.
    for N in (200, 4096, 6181, 2_200_000):
        k1, k2, k3, key = jax.random.split(key, 4)
        group = jax.random.bernoulli(k3, 0.4, (N,)).astype(jnp.int32)
        # correlate logits with the group so the reference correlation is well
        # away from 0 (keeps the f32-vs-f64 comparison well conditioned)
        outputs = (jax.random.normal(k1, (N,), dtype=jnp.float32) * 2.0
                   + group.astype(jnp.float32))
        labels = jax.random.bernoulli(k2, 0.5, (N,)).astype(jnp.int32)

        for crit in ("EqOdd", "EqOpp"):
            res = jax.block_until_ready(
                corr_loss(outputs, labels, group, fair_criteria=crit))
            ref = reference(outputs, labels, group, crit)
            np.testing.assert_allclose(np.asarray(res)[0], ref, rtol=2e-3, atol=1e-6)

    print("KERNEL_OK")
</pallas_src>

<mosaic_0001>
module attributes {stable_mosaic.version = 11 : i64} {
  func.func @_corr_stats_kernel(%arg0: i32, %arg1: i32, %arg2: memref<8x128xf32, #tpu.memory_space<vmem>>, %arg3: memref<8x128xi32, #tpu.memory_space<vmem>>, %arg4: memref<8x128xi32, #tpu.memory_space<vmem>>, %arg5: memref<96x128xf32, #tpu.memory_space<vmem>>) attributes {dimension_semantics = [#tpu.dimension_semantics<parallel>, #tpu.dimension_semantics<arbitrary>], iteration_bounds = array<i64: 1, 1>, scalar_prefetch = 0 : i64, scratch_operands = 0 : i64, tpu.core_type = #tpu.core_type<tc>, window_params = [{transform_indices = @transform_0, window_bounds = array<i64: 8, 128>}, {transform_indices = @transform_1, window_bounds = array<i64: 8, 128>}, {transform_indices = @transform_2, window_bounds = array<i64: 8, 128>}, {transform_indices = @transform_3, window_bounds = array<i64: 96, 128>}]} {
    %c0_i32 = arith.constant 0 : i32
    %0 = arith.cmpi eq, %arg1, %c0_i32 : i32
    %1 = arith.extui %0 : i1 to i32
    %c0_i32_0 = arith.constant 0 : i32
    %2 = arith.cmpi ne, %1, %c0_i32_0 : i32
    scf.if %2 {
      %cst = arith.constant 0.000000e+00 : f32
      %16 = vector.broadcast %cst : f32 to vector<96x128xf32>
      %c0 = arith.constant 0 : index
      %c0_5 = arith.constant 0 : index
      %17 = vector.load %arg5[%c0, %c0_5] : memref<96x128xf32, #tpu.memory_space<vmem>>, vector<96x128xf32>
      tpu.vector_store %arg5[%c0, %c0_5], %16 {strides = array<i32>} : memref<96x128xf32, #tpu.memory_space<vmem>>, vector<96x128xf32>,
    } else {
    }
    %c1_i32 = arith.constant 1 : i32
    %3 = arith.muli %arg0, %c1_i32 : i32
    %4 = arith.addi %3, %arg1 : i32
    %c1024_i32 = arith.constant 1024 : i32
    %5 = arith.muli %4, %c1024_i32 : i32
    %c200_i32 = arith.constant 200 : i32
    %6 = arith.cmpi slt, %5, %c200_i32 : i32
    %c1024_i32_1 = arith.constant 1024 : i32
    %7 = arith.addi %5, %c1024_i32_1 : i32
    %c200_i32_2 = arith.constant 200 : i32
    %8 = arith.cmpi sle, %7, %c200_i32_2 : i32
    %9 = arith.andi %6, %8 : i1
    %10 = arith.extui %9 : i1 to i32
    %c0_i32_3 = arith.constant 0 : i32
    %11 = arith.cmpi ne, %10, %c0_i32_3 : i32
    scf.if %11 {
      %c0 = arith.constant 0 : index
      %c0_5 = arith.constant 0 : index
      %16 = vector.load %arg2[%c0, %c0_5] : memref<8x128xf32, #tpu.memory_space<vmem>>, vector<8x128xf32>
      %c0_6 = arith.constant 0 : index
      %c0_7 = arith.constant 0 : index
      %17 = vector.load %arg4[%c0_6, %c0_7] : memref<8x128xi32, #tpu.memory_space<vmem>>, vector<8x128xi32>
      %18 = arith.sitofp %17 : vector<8x128xi32> to vector<8x128xf32>
      %c0_8 = arith.constant 0 : index
      %c0_9 = arith.constant 0 : index
      %19 = vector.load %arg3[%c0_8, %c0_9] : memref<8x128xi32, #tpu.memory_space<vmem>>, vector<8x128xi32>
      %cst = arith.constant 0.000000e+00 : f32
      %20 = vector.broadcast %cst : f32 to vector<8x128xf32>
      %21 = arith.minimumf %16, %20 : vector<8x128xf32>
      %22 = math.absf %16 : vector<8x128xf32>
      %cst_10 = arith.constant 0.000000e+00 : f32
      %23 = vector.broadcast %cst_10 : f32 to vector<8x128xf32>
      %24 = arith.subf %23, %22 : vector<8x128xf32>
      %25 = math.exp %24 : vector<8x128xf32>
      %cst_11 = arith.constant 1.000000e+00 : f32
      %26 = vector.broadcast %cst_11 : f32 to vector<8x128xf32>
      %27 = arith.addf %26, %25 : vector<8x128xf32>
      %28 = math.log %27 : vector<8x128xf32>
      %29 = arith.subf %21, %28 : vector<8x128xf32>
      %30 = arith.mulf %29, %18 : vector<8x128xf32>
      %31 = arith.mulf %29, %29 : vector<8x128xf32>
      %32 = arith.mulf %18, %18 : vector<8x128xf32>
      %cst_12 = arith.constant 1.000000e+00 : f32
      %33 = vector.broadcast %cst_12 : f32 to vector<8x128xf32>
      %34 = vector.shape_cast %29 : vector<8x128xf32> to vector<1x8x128xf32>
      %cst_13 = arith.constant dense<0.000000e+00> : vector<8x128xf32>
      %35 = vector.multi_reduction <add>, %34, %cst_13 [0] : vector<1x8x128xf32> to vector<8x128xf32>
      %36 = vector.shape_cast %18 : vector<8x128xf32> to vector<1x8x128xf32>
      %cst_14 = arith.constant dense<0.000000e+00> : vector<8x128xf32>
      %37 = vector.multi_reduction <add>, %36, %cst_14 [0] : vector<1x8x128xf32> to vector<8x128xf32>
      %38 = vector.shape_cast %30 : vector<8x128xf32> to vector<1x8x128xf32>
      %cst_15 = arith.constant dense<0.000000e+00> : vector<8x128xf32>
      %39 = vector.multi_reduction <add>, %38, %cst_15 [0] : vector<1x8x128xf32> to vector<8x128xf32>
      %40 = vector.shape_cast %31 : vector<8x128xf32> to vector<1x8x128xf32>
      %cst_16 = arith.constant dense<0.000000e+00> : vector<8x128xf32>
      %41 = vector.multi_reduction <add>, %40, %cst_16 [0] : vector<1x8x128xf32> to vector<8x128xf32>
      %42 = vector.shape_cast %32 : vector<8x128xf32> to vector<1x8x128xf32>
      %cst_17 = arith.constant dense<0.000000e+00> : vector<8x128xf32>
      %43 = vector.multi_reduction <add>, %42, %cst_17 [0] : vector<1x8x128xf32> to vector<8x128xf32>
      %c1_i32_18 = arith.constant 1 : i32
      %44 = vector.broadcast %c1_i32_18 : i32 to vector<8x128xi32>
      %45 = arith.cmpi eq, %19, %44 : vector<8x128xi32>
      %46 = arith.extui %45 : vector<8x128xi1> to vector<8x128xi32>
      %47 = arith.sitofp %46 : vector<8x128xi32> to vector<8x128xf32>
      %48 = vector.shape_cast %47 : vector<8x128xf32> to vector<1x8x128xf32>
      %cst_19 = arith.constant dense<0.000000e+00> : vector<8x128xf32>
      %49 = vector.multi_reduction <add>, %48, %cst_19 [0] : vector<1x8x128xf32> to vector<8x128xf32>
      %50 = arith.mulf %47, %29 : vector<8x128xf32>
      %51 = vector.shape_cast %50 : vector<8x128xf32> to vector<1x8x128xf32>
      %cst_20 = arith.constant dense<0.000000e+00> : vector<8x128xf32>
      %52 = vector.multi_reduction <add>, %51, %cst_20 [0] : vector<1x8x128xf32> to vector<8x128xf32>
      %53 = arith.mulf %47, %18 : vector<8x128xf32>
      %54 = vector.shape_cast %53 : vector<8x128xf32> to vector<1x8x128xf32>
      %cst_21 = arith.constant dense<0.000000e+00> : vector<8x128xf32>
      %55 = vector.multi_reduction <add>, %54, %cst_21 [0] : vector<1x8x128xf32> to vector<8x128xf32>
      %56 = arith.mulf %47, %30 : vector<8x128xf32>
      %57 = vector.shape_cast %56 : vector<8x128xf32> to vector<1x8x128xf32>
      %cst_22 = arith.constant dense<0.000000e+00> : vector<8x128xf32>
      %58 = vector.multi_reduction <add>, %57, %cst_22 [0] : vector<1x8x128xf32> to vector<8x128xf32>
      %59 = arith.mulf %47, %31 : vector<8x128xf32>
      %60 = vector.shape_cast %59 : vector<8x128xf32> to vector<1x8x128xf32>
      %cst_23 = arith.constant dense<0.000000e+00> : vector<8x128xf32>
      %61 = vector.multi_reduction <add>, %60, %cst_23 [0] : vector<1x8x128xf32> to vector<8x128xf32>
      %62 = arith.mulf %47, %32 : vector<8x128xf32>
      %63 = vector.shape_cast %62 : vector<8x128xf32> to vector<1x8x128xf32>
      %cst_24 = arith.constant dense<0.000000e+00> : vector<8x128xf32>
      %64 = vector.multi_reduction <add>, %63, %cst_24 [0] : vector<1x8x128xf32> to vector<8x128xf32>
      %c0_25 = arith.constant 0 : index
      %c0_26 = arith.constant 0 : index
      %65 = vector.load %arg5[%c0_25, %c0_26] : memref<96x128xf32, #tpu.memory_space<vmem>>, vector<8x128xf32>
      %66 = arith.addf %65, %33 : vector<8x128xf32>
      %c0_27 = arith.constant 0 : index
      %c0_28 = arith.constant 0 : index
      %67 = vector.load %arg5[%c0_27, %c0_28] : memref<96x128xf32, #tpu.memory_space<vmem>>, vector<8x128xf32>
      tpu.vector_store %arg5[%c0_27, %c0_28], %66 {strides = array<i32>} : memref<96x128xf32, #tpu.memory_space<vmem>>, vector<8x128xf32>,
      %c8 = arith.constant 8 : index
      %c0_29 = arith.constant 0 : index
      %68 = vector.load %arg5[%c8, %c0_29] : memref<96x128xf32, #tpu.memory_space<vmem>>, vector<8x128xf32>
      %69 = arith.addf %68, %35 : vector<8x128xf32>
      %c8_30 = arith.constant 8 : index
      %c0_31 = arith.constant 0 : index
      %70 = vector.load %arg5[%c8_30, %c0_31] : memref<96x128xf32, #tpu.memory_space<vmem>>, vector<8x128xf32>
      tpu.vector_store %arg5[%c8_30, %c0_31], %69 {strides = array<i32>} : memref<96x128xf32, #tpu.memory_space<vmem>>, vector<8x128xf32>,
      %c16 = arith.constant 16 : index
      %c0_32 = arith.constant 0 : index
      %71 = vector.load %arg5[%c16, %c0_32] : memref<96x128xf32, #tpu.memory_space<vmem>>, vector<8x128xf32>
      %72 = arith.addf %71, %37 : vector<8x128xf32>
      %c16_33 = arith.constant 16 : index
      %c0_34 = arith.constant 0 : index
      %73 = vector.load %arg5[%c16_33, %c0_34] : memref<96x128xf32, #tpu.memory_space<vmem>>, vector<8x128xf32>
      tpu.vector_store %arg5[%c16_33, %c0_34], %72 {strides = array<i32>} : memref<96x128xf32, #tpu.memory_space<vmem>>, vector<8x128xf32>,
      %c24 = arith.constant 24 : index
      %c0_35 = arith.constant 0 : index
      %74 = vector.load %arg5[%c24, %c0_35] : memref<96x128xf32, #tpu.memory_space<vmem>>, vector<8x128xf32>
      %75 = arith.addf %74, %39 : vector<8x128xf32>
      %c24_36 = arith.constant 24 : index
      %c0_37 = arith.constant 0 : index
      %76 = vector.load %arg5[%c24_36, %c0_37] : memref<96x128xf32, #tpu.memory_space<vmem>>, vector<8x128xf32>
      tpu.vector_store %arg5[%c24_36, %c0_37], %75 {strides = array<i32>} : memref<96x128xf32, #tpu.memory_space<vmem>>, vector<8x128xf32>,
      %c32 = arith.constant 32 : index
      %c0_38 = arith.constant 0 : index
      %77 = vector.load %arg5[%c32, %c0_38] : memref<96x128xf32, #tpu.memory_space<vmem>>, vector<8x128xf32>
      %78 = arith.addf %77, %41 : vector<8x128xf32>
      %c32_39 = arith.constant 32 : index
      %c0_40 = arith.constant 0 : index
      %79 = vector.load %arg5[%c32_39, %c0_40] : memref<96x128xf32, #tpu.memory_space<vmem>>, vector<8x128xf32>
      tpu.vector_store %arg5[%c32_39, %c0_40], %78 {strides = array<i32>} : memref<96x128xf32, #tpu.memory_space<vmem>>, vector<8x128xf32>,
      %c40 = arith.constant 40 : index
      %c0_41 = arith.constant 0 : index
      %80 = vector.load %arg5[%c40, %c0_41] : memref<96x128xf32, #tpu.memory_space<vmem>>, vector<8x128xf32>
      %81 = arith.addf %80, %43 : vector<8x128xf32>
      %c40_42 = arith.constant 40 : index
      %c0_43 = arith.constant 0 : index
      %82 = vector.load %arg5[%c40_42, %c0_43] : memref<96x128xf32, #tpu.memory_space<vmem>>, vector<8x128xf32>
      tpu.vector_store %arg5[%c40_42, %c0_43], %81 {strides = array<i32>} : memref<96x128xf32, #tpu.memory_space<vmem>>, vector<8x128xf32>,
      %c48 = arith.constant 48 : index
      %c0_44 = arith.constant 0 : index
      %83 = vector.load %arg5[%c48, %c0_44] : memref<96x128xf32, #tpu.memory_space<vmem>>, vector<8x128xf32>
      %84 = arith.addf %83, %49 : vector<8x128xf32>
      %c48_45 = arith.constant 48 : index
      %c0_46 = arith.constant 0 : index
      %85 = vector.load %arg5[%c48_45, %c0_46] : memref<96x128xf32, #tpu.memory_space<vmem>>, vector<8x128xf32>
      tpu.vector_store %arg5[%c48_45, %c0_46], %84 {strides = array<i32>} : memref<96x128xf32, #tpu.memory_space<vmem>>, vector<8x128xf32>,
      %c56 = arith.constant 56 : index
      %c0_47 = arith.constant 0 : index
      %86 = vector.load %arg5[%c56, %c0_47] : memref<96x128xf32, #tpu.memory_space<vmem>>, vector<8x128xf32>
      %87 = arith.addf %86, %52 : vector<8x128xf32>
      %c56_48 = arith.constant 56 : index
      %c0_49 = arith.constant 0 : index
      %88 = vector.load %arg5[%c56_48, %c0_49] : memref<96x128xf32, #tpu.memory_space<vmem>>, vector<8x128xf32>
      tpu.vector_store %arg5[%c56_48, %c0_49], %87 {strides = array<i32>} : memref<96x128xf32, #tpu.memory_space<vmem>>, vector<8x128xf32>,
      %c64 = arith.constant 64 : index
      %c0_50 = arith.constant 0 : index
      %89 = vector.load %arg5[%c64, %c0_50] : memref<96x128xf32, #tpu.memory_space<vmem>>, vector<8x128xf32>
      %90 = arith.addf %89, %55 : vector<8x128xf32>
      %c64_51 = arith.constant 64 : index
      %c0_52 = arith.constant 0 : index
      %91 = vector.load %arg5[%c64_51, %c0_52] : memref<96x128xf32, #tpu.memory_space<vmem>>, vector<8x128xf32>
      tpu.vector_store %arg5[%c64_51, %c0_52], %90 {strides = array<i32>} : memref<96x128xf32, #tpu.memory_space<vmem>>, vector<8x128xf32>,
      %c72 = arith.constant 72 : index
      %c0_53 = arith.constant 0 : index
      %92 = vector.load %arg5[%c72, %c0_53] : memref<96x128xf32, #tpu.memory_space<vmem>>, vector<8x128xf32>
      %93 = arith.addf %92, %58 : vector<8x128xf32>
      %c72_54 = arith.constant 72 : index
      %c0_55 = arith.constant 0 : index
      %94 = vector.load %arg5[%c72_54, %c0_55] : memref<96x128xf32, #tpu.memory_space<vmem>>, vector<8x128xf32>
      tpu.vector_store %arg5[%c72_54, %c0_55], %93 {strides = array<i32>} : memref<96x128xf32, #tpu.memory_space<vmem>>, vector<8x128xf32>,
      %c80 = arith.constant 80 : index
      %c0_56 = arith.constant 0 : index
      %95 = vector.load %arg5[%c80, %c0_56] : memref<96x128xf32, #tpu.memory_space<vmem>>, vector<8x128xf32>
      %96 = arith.addf %95, %61 : vector<8x128xf32>
      %c80_57 = arith.constant 80 : index
      %c0_58 = arith.constant 0 : index
      %97 = vector.load %arg5[%c80_57, %c0_58] : memref<96x128xf32, #tpu.memory_space<vmem>>, vector<8x128xf32>
      tpu.vector_store %arg5[%c80_57, %c0_58], %96 {strides = array<i32>} : memref<96x128xf32, #tpu.memory_space<vmem>>, vector<8x128xf32>,
      %c88 = arith.constant 88 : index
      %c0_59 = arith.constant 0 : index
      %98 = vector.load %arg5[%c88, %c0_59] : memref<96x128xf32, #tpu.memory_space<vmem>>, vector<8x128xf32>
      %99 = arith.addf %98, %64 : vector<8x128xf32>
      %c88_60 = arith.constant 88 : index
      %c0_61 = arith.constant 0 : index
      %100 = vector.load %arg5[%c88_60, %c0_61] : memref<96x128xf32, #tpu.memory_space<vmem>>, vector<8x128xf32>
      tpu.vector_store %arg5[%c88_60, %c0_61], %99 {strides = array<i32>} : memref<96x128xf32, #tpu.memory_space<vmem>>, vector<8x128xf32>,
    } else {
    }
    %true = arith.constant true
    %12 = arith.xori %8, %true : i1
    %13 = arith.andi %6, %12 : i1
    %14 = arith.extui %13 : i1 to i32
    %c0_i32_4 = arith.constant 0 : i32
    %15 = arith.cmpi ne, %14, %c0_i32_4 : i32
    scf.if %15 {
      %c0 = arith.constant 0 : index
      %c0_5 = arith.constant 0 : index
      %16 = vector.load %arg2[%c0, %c0_5] : memref<8x128xf32, #tpu.memory_space<vmem>>, vector<8x128xf32>
      %c0_6 = arith.constant 0 : index
      %c0_7 = arith.constant 0 : index
      %17 = vector.load %arg4[%c0_6, %c0_7] : memref<8x128xi32, #tpu.memory_space<vmem>>, vector<8x128xi32>
      %18 = arith.sitofp %17 : vector<8x128xi32> to vector<8x128xf32>
      %c0_8 = arith.constant 0 : index
      %c0_9 = arith.constant 0 : index
      %19 = vector.load %arg3[%c0_8, %c0_9] : memref<8x128xi32, #tpu.memory_space<vmem>>, vector<8x128xi32>
      %20 = tpu.iota {dimensions = array<i32: 0>} : vector<8x128xi32>
      %21 = tpu.iota {dimensions = array<i32: 1>} : vector<8x128xi32>
      %c128_i32 = arith.constant 128 : i32
      %22 = vector.broadcast %c128_i32 : i32 to vector<8x128xi32>
      %23 = arith.muli %20, %22 : vector<8x128xi32>
      %24 = vector.broadcast %5 : i32 to vector<8x128xi32>
      %25 = arith.addi %24, %23 : vector<8x128xi32>
      %26 = arith.addi %25, %21 : vector<8x128xi32>
      %c200_i32_10 = arith.constant 200 : i32
      %27 = vector.broadcast %c200_i32_10 : i32 to vector<8x128xi32>
      %28 = arith.cmpi slt, %26, %27 : vector<8x128xi32>
      %29 = arith.extui %28 : vector<8x128xi1> to vector<8x128xi32>
      %30 = arith.sitofp %29 : vector<8x128xi32> to vector<8x128xf32>
      %cst = arith.constant 0.000000e+00 : f32
      %31 = vector.broadcast %cst : f32 to vector<8x128xf32>
      %32 = arith.select %28, %16, %31 : vector<8x128xi1>, vector<8x128xf32>
      %cst_11 = arith.constant 0.000000e+00 : f32
      %33 = vector.broadcast %cst_11 : f32 to vector<8x128xf32>
      %34 = arith.select %28, %18, %33 : vector<8x128xi1>, vector<8x128xf32>
      %cst_12 = arith.constant 0.000000e+00 : f32
      %35 = vector.broadcast %cst_12 : f32 to vector<8x128xf32>
      %36 = arith.minimumf %32, %35 : vector<8x128xf32>
      %37 = math.absf %32 : vector<8x128xf32>
      %cst_13 = arith.constant 0.000000e+00 : f32
      %38 = vector.broadcast %cst_13 : f32 to vector<8x128xf32>
      %39 = arith.subf %38, %37 : vector<8x128xf32>
      %40 = math.exp %39 : vector<8x128xf32>
      %cst_14 = arith.constant 1.000000e+00 : f32
      %41 = vector.broadcast %cst_14 : f32 to vector<8x128xf32>
      %42 = arith.addf %41, %40 : vector<8x128xf32>
      %43 = math.log %42 : vector<8x128xf32>
      %44 = arith.subf %36, %43 : vector<8x128xf32>
      %45 = arith.mulf %44, %34 : vector<8x128xf32>
      %46 = arith.mulf %44, %44 : vector<8x128xf32>
      %47 = arith.mulf %34, %34 : vector<8x128xf32>
      %48 = vector.shape_cast %30 : vector<8x128xf32> to vector<1x8x128xf32>
      %cst_15 = arith.constant dense<0.000000e+00> : vector<8x128xf32>
      %49 = vector.multi_reduction <add>, %48, %cst_15 [0] : vector<1x8x128xf32> to vector<8x128xf32>
      %50 = arith.mulf %30, %44 : vector<8x128xf32>
      %51 = vector.shape_cast %50 : vector<8x128xf32> to vector<1x8x128xf32>
      %cst_16 = arith.constant dense<0.000000e+00> : vector<8x128xf32>
      %52 = vector.multi_reduction <add>, %51, %cst_16 [0] : vector<1x8x128xf32> to vector<8x128xf32>
      %53 = vector.shape_cast %34 : vector<8x128xf32> to vector<1x8x128xf32>
      %cst_17 = arith.constant dense<0.000000e+00> : vector<8x128xf32>
      %54 = vector.multi_reduction <add>, %53, %cst_17 [0] : vector<1x8x128xf32> to vector<8x128xf32>
      %55 = vector.shape_cast %45 : vector<8x128xf32> to vector<1x8x128xf32>
      %cst_18 = arith.constant dense<0.000000e+00> : vector<8x128xf32>
      %56 = vector.multi_reduction <add>, %55, %cst_18 [0] : vector<1x8x128xf32> to vector<8x128xf32>
      %57 = arith.mulf %30, %46 : vector<8x128xf32>
      %58 = vector.shape_cast %57 : vector<8x128xf32> to vector<1x8x128xf32>
      %cst_19 = arith.constant dense<0.000000e+00> : vector<8x128xf32>
      %59 = vector.multi_reduction <add>, %58, %cst_19 [0] : vector<1x8x128xf32> to vector<8x128xf32>
      %60 = vector.shape_cast %47 : vector<8x128xf32> to vector<1x8x128xf32>
      %cst_20 = arith.constant dense<0.000000e+00> : vector<8x128xf32>
      %61 = vector.multi_reduction <add>, %60, %cst_20 [0] : vector<1x8x128xf32> to vector<8x128xf32>
      %c1_i32_21 = arith.constant 1 : i32
      %62 = vector.broadcast %c1_i32_21 : i32 to vector<8x128xi32>
      %63 = arith.cmpi eq, %19, %62 : vector<8x128xi32>
      %64 = arith.extui %63 : vector<8x128xi1> to vector<8x128xi32>
      %65 = arith.sitofp %64 : vector<8x128xi32> to vector<8x128xf32>
      %66 = arith.mulf %65, %30 : vector<8x128xf32>
      %67 = vector.shape_cast %66 : vector<8x128xf32> to vector<1x8x128xf32>
      %cst_22 = arith.constant dense<0.000000e+00> : vector<8x128xf32>
      %68 = vector.multi_reduction <add>, %67, %cst_22 [0] : vector<1x8x128xf32> to vector<8x128xf32>
      %69 = arith.mulf %66, %44 : vector<8x128xf32>
      %70 = vector.shape_cast %69 : vector<8x128xf32> to vector<1x8x128xf32>
      %cst_23 = arith.constant dense<0.000000e+00> : vector<8x128xf32>
      %71 = vector.multi_reduction <add>, %70, %cst_23 [0] : vector<1x8x128xf32> to vector<8x128xf32>
      %72 = arith.mulf %66, %34 : vector<8x128xf32>
      %73 = vector.shape_cast %72 : vector<8x128xf32> to vector<1x8x128xf32>
      %cst_24 = arith.constant dense<0.000000e+00> : vector<8x128xf32>
      %74 = vector.multi_reduction <add>, %73, %cst_24 [0] : vector<1x8x128xf32> to vector<8x128xf32>
      %75 = arith.mulf %66, %45 : vector<8x128xf32>
      %76 = vector.shape_cast %75 : vector<8x128xf32> to vector<1x8x128xf32>
      %cst_25 = arith.constant dense<0.000000e+00> : vector<8x128xf32>
      %77 = vector.multi_reduction <add>, %76, %cst_25 [0] : vector<1x8x128xf32> to vector<8x128xf32>
      %78 = arith.mulf %66, %46 : vector<8x128xf32>
      %79 = vector.shape_cast %78 : vector<8x128xf32> to vector<1x8x128xf32>
      %cst_26 = arith.constant dense<0.000000e+00> : vector<8x128xf32>
      %80 = vector.multi_reduction <add>, %79, %cst_26 [0] : vector<1x8x128xf32> to vector<8x128xf32>
      %81 = arith.mulf %66, %47 : vector<8x128xf32>
      %82 = vector.shape_cast %81 : vector<8x128xf32> to vector<1x8x128xf32>
      %cst_27 = arith.constant dense<0.000000e+00> : vector<8x128xf32>
      %83 = vector.multi_reduction <add>, %82, %cst_27 [0] : vector<1x8x128xf32> to vector<8x128xf32>
      %c0_28 = arith.constant 0 : index
      %c0_29 = arith.constant 0 : index
      %84 = vector.load %arg5[%c0_28, %c0_29] : memref<96x128xf32, #tpu.memory_space<vmem>>, vector<8x128xf32>
      %85 = arith.addf %84, %49 : vector<8x128xf32>
      %c0_30 = arith.constant 0 : index
      %c0_31 = arith.constant 0 : index
      %86 = vector.load %arg5[%c0_30, %c0_31] : memref<96x128xf32, #tpu.memory_space<vmem>>, vector<8x128xf32>
      tpu.vector_store %arg5[%c0_30, %c0_31], %85 {strides = array<i32>} : memref<96x128xf32, #tpu.memory_space<vmem>>, vector<8x128xf32>,
      %c8 = arith.constant 8 : index
      %c0_32 = arith.constant 0 : index
      %87 = vector.load %arg5[%c8, %c0_32] : memref<96x128xf32, #tpu.memory_space<vmem>>, vector<8x128xf32>
      %88 = arith.addf %87, %52 : vector<8x128xf32>
      %c8_33 = arith.constant 8 : index
      %c0_34 = arith.constant 0 : index
      %89 = vector.load %arg5[%c8_33, %c0_34] : memref<96x128xf32, #tpu.memory_space<vmem>>, vector<8x128xf32>
      tpu.vector_store %arg5[%c8_33, %c0_34], %88 {strides = array<i32>} : memref<96x128xf32, #tpu.memory_space<vmem>>, vector<8x128xf32>,
      %c16 = arith.constant 16 : index
      %c0_35 = arith.constant 0 : index
      %90 = vector.load %arg5[%c16, %c0_35] : memref<96x128xf32, #tpu.memory_space<vmem>>, vector<8x128xf32>
      %91 = arith.addf %90, %54 : vector<8x128xf32>
      %c16_36 = arith.constant 16 : index
      %c0_37 = arith.constant 0 : index
      %92 = vector.load %arg5[%c16_36, %c0_37] : memref<96x128xf32, #tpu.memory_space<vmem>>, vector<8x128xf32>
      tpu.vector_store %arg5[%c16_36, %c0_37], %91 {strides = array<i32>} : memref<96x128xf32, #tpu.memory_space<vmem>>, vector<8x128xf32>,
      %c24 = arith.constant 24 : index
      %c0_38 = arith.constant 0 : index
      %93 = vector.load %arg5[%c24, %c0_38] : memref<96x128xf32, #tpu.memory_space<vmem>>, vector<8x128xf32>
      %94 = arith.addf %93, %56 : vector<8x128xf32>
      %c24_39 = arith.constant 24 : index
      %c0_40 = arith.constant 0 : index
      %95 = vector.load %arg5[%c24_39, %c0_40] : memref<96x128xf32, #tpu.memory_space<vmem>>, vector<8x128xf32>
      tpu.vector_store %arg5[%c24_39, %c0_40], %94 {strides = array<i32>} : memref<96x128xf32, #tpu.memory_space<vmem>>, vector<8x128xf32>,
      %c32 = arith.constant 32 : index
      %c0_41 = arith.constant 0 : index
      %96 = vector.load %arg5[%c32, %c0_41] : memref<96x128xf32, #tpu.memory_space<vmem>>, vector<8x128xf32>
      %97 = arith.addf %96, %59 : vector<8x128xf32>
      %c32_42 = arith.constant 32 : index
      %c0_43 = arith.constant 0 : index
      %98 = vector.load %arg5[%c32_42, %c0_43] : memref<96x128xf32, #tpu.memory_space<vmem>>, vector<8x128xf32>
      tpu.vector_store %arg5[%c32_42, %c0_43], %97 {strides = array<i32>} : memref<96x128xf32, #tpu.memory_space<vmem>>, vector<8x128xf32>,
      %c40 = arith.constant 40 : index
      %c0_44 = arith.constant 0 : index
      %99 = vector.load %arg5[%c40, %c0_44] : memref<96x128xf32, #tpu.memory_space<vmem>>, vector<8x128xf32>
      %100 = arith.addf %99, %61 : vector<8x128xf32>
      %c40_45 = arith.constant 40 : index
      %c0_46 = arith.constant 0 : index
      %101 = vector.load %arg5[%c40_45, %c0_46] : memref<96x128xf32, #tpu.memory_space<vmem>>, vector<8x128xf32>
      tpu.vector_store %arg5[%c40_45, %c0_46], %100 {strides = array<i32>} : memref<96x128xf32, #tpu.memory_space<vmem>>, vector<8x128xf32>,
      %c48 = arith.constant 48 : index
      %c0_47 = arith.constant 0 : index
      %102 = vector.load %arg5[%c48, %c0_47] : memref<96x128xf32, #tpu.memory_space<vmem>>, vector<8x128xf32>
      %103 = arith.addf %102, %68 : vector<8x128xf32>
      %c48_48 = arith.constant 48 : index
      %c0_49 = arith.constant 0 : index
      %104 = vector.load %arg5[%c48_48, %c0_49] : memref<96x128xf32, #tpu.memory_space<vmem>>, vector<8x128xf32>
      tpu.vector_store %arg5[%c48_48, %c0_49], %103 {strides = array<i32>} : memref<96x128xf32, #tpu.memory_space<vmem>>, vector<8x128xf32>,
      %c56 = arith.constant 56 : index
      %c0_50 = arith.constant 0 : index
      %105 = vector.load %arg5[%c56, %c0_50] : memref<96x128xf32, #tpu.memory_space<vmem>>, vector<8x128xf32>
      %106 = arith.addf %105, %71 : vector<8x128xf32>
      %c56_51 = arith.constant 56 : index
      %c0_52 = arith.constant 0 : index
      %107 = vector.load %arg5[%c56_51, %c0_52] : memref<96x128xf32, #tpu.memory_space<vmem>>, vector<8x128xf32>
      tpu.vector_store %arg5[%c56_51, %c0_52], %106 {strides = array<i32>} : memref<96x128xf32, #tpu.memory_space<vmem>>, vector<8x128xf32>,
      %c64 = arith.constant 64 : index
      %c0_53 = arith.constant 0 : index
      %108 = vector.load %arg5[%c64, %c0_53] : memref<96x128xf32, #tpu.memory_space<vmem>>, vector<8x128xf32>
      %109 = arith.addf %108, %74 : vector<8x128xf32>
      %c64_54 = arith.constant 64 : index
      %c0_55 = arith.constant 0 : index
      %110 = vector.load %arg5[%c64_54, %c0_55] : memref<96x128xf32, #tpu.memory_space<vmem>>, vector<8x128xf32>
      tpu.vector_store %arg5[%c64_54, %c0_55], %109 {strides = array<i32>} : memref<96x128xf32, #tpu.memory_space<vmem>>, vector<8x128xf32>,
      %c72 = arith.constant 72 : index
      %c0_56 = arith.constant 0 : index
      %111 = vector.load %arg5[%c72, %c0_56] : memref<96x128xf32, #tpu.memory_space<vmem>>, vector<8x128xf32>
      %112 = arith.addf %111, %77 : vector<8x128xf32>
      %c72_57 = arith.constant 72 : index
      %c0_58 = arith.constant 0 : index
      %113 = vector.load %arg5[%c72_57, %c0_58] : memref<96x128xf32, #tpu.memory_space<vmem>>, vector<8x128xf32>
      tpu.vector_store %arg5[%c72_57, %c0_58], %112 {strides = array<i32>} : memref<96x128xf32, #tpu.memory_space<vmem>>, vector<8x128xf32>,
      %c80 = arith.constant 80 : index
      %c0_59 = arith.constant 0 : index
      %114 = vector.load %arg5[%c80, %c0_59] : memref<96x128xf32, #tpu.memory_space<vmem>>, vector<8x128xf32>
      %115 = arith.addf %114, %80 : vector<8x128xf32>
      %c80_60 = arith.constant 80 : index
      %c0_61 = arith.constant 0 : index
      %116 = vector.load %arg5[%c80_60, %c0_61] : memref<96x128xf32, #tpu.memory_space<vmem>>, vector<8x128xf32>
      tpu.vector_store %arg5[%c80_60, %c0_61], %115 {strides = array<i32>} : memref<96x128xf32, #tpu.memory_space<vmem>>, vector<8x128xf32>,
      %c88 = arith.constant 88 : index
      %c0_62 = arith.constant 0 : index
      %117 = vector.load %arg5[%c88, %c0_62] : memref<96x128xf32, #tpu.memory_space<vmem>>, vector<8x128xf32>
      %118 = arith.addf %117, %83 : vector<8x128xf32>
      %c88_63 = arith.constant 88 : index
      %c0_64 = arith.constant 0 : index
      %119 = vector.load %arg5[%c88_63, %c0_64] : memref<96x128xf32, #tpu.memory_space<vmem>>, vector<8x128xf32>
      tpu.vector_store %arg5[%c88_63, %c0_64], %118 {strides = array<i32>} : memref<96x128xf32, #tpu.memory_space<vmem>>, vector<8x128xf32>,
    } else {
    }
    return
  }
  func.func @transform_0(%arg0: i32, %arg1: i32) -> (i32, i32) {
    %c1_i32 = arith.constant 1 : i32
    %0 = arith.muli %arg0, %c1_i32 : i32
    %1 = arith.addi %0, %arg1 : i32
    %c0_i32 = arith.constant 0 : i32
    %2 = arith.minsi %1, %c0_i32 : i32
    %c0_i32_0 = arith.constant 0 : i32
    %c0_i32_1 = arith.constant 0 : i32
    return %2, %c0_i32_0 : i32, i32
  }
  func.func @transform_1(%arg0: i32, %arg1: i32) -> (i32, i32) {
    %c1_i32 = arith.constant 1 : i32
    %0 = arith.muli %arg0, %c1_i32 : i32
    %1 = arith.addi %0, %arg1 : i32
    %c0_i32 = arith.constant 0 : i32
    %2 = arith.minsi %1, %c0_i32 : i32
    %c0_i32_0 = arith.constant 0 : i32
    %c0_i32_1 = arith.constant 0 : i32
    return %2, %c0_i32_0 : i32, i32
  }
  func.func @transform_2(%arg0: i32, %arg1: i32) -> (i32, i32) {
    %c1_i32 = arith.constant 1 : i32
    %0 = arith.muli %arg0, %c1_i32 : i32
    %1 = arith.addi %0, %arg1 : i32
    %c0_i32 = arith.constant 0 : i32
    %2 = arith.minsi %1, %c0_i32 : i32
    %c0_i32_0 = arith.constant 0 : i32
    %c0_i32_1 = arith.constant 0 : i32
    return %2, %c0_i32_0 : i32, i32
  }
  func.func @transform_3(%arg0: i32, %arg1: i32) -> (i32, i32) {
    %c0_i32 = arith.constant 0 : i32
    %c0_i32_0 = arith.constant 0 : i32
    return %arg0, %c0_i32 : i32, i32
  }
}

</mosaic_0001>

<llo_original>
// kernel: tpu_custom_call.1
$region0: #{tpu_custom_call.1}
  #allocation0 [shape = 'u32[]', space=smem, size = 0x4, offset = 0x4, fixed_abs, tag = 'smem constant byte address 0x4 - core index']
  #allocation1 [shape = 'u32[144,128]{1,0:T(1,128)}', space=vmem, size = 0x12000, scoped, tag = 'internal scratch']
  %s0 = inlined_call_operand.hbm [shape: f32[8,128], index: 0, kind: input, shape index: {}]
  %s1 = inlined_call_operand.hbm [shape: s32[8,128], index: 1, kind: input, shape index: {}]
  %s2 = inlined_call_operand.hbm [shape: s32[8,128], index: 2, kind: input, shape index: {}]
  %s3 = inlined_call_operand.hbm [shape: f32[96,128], index: 3, kind: output, shape index: {}]
  %s4 = sld [smem:[#allocation0]]
  $region46: #{tpu_custom_call.1} parent=0
    _
  %s6 = ssub.s32 1, %s4
  %s7 = scalar_select 0, %s6, %s4
  $region1: #{tpu_custom_call.1} parent=0
    #allocation2 [shape = 'u8[4096]{0}', space=vmem, size = 0x1000, scoped, tag = 'input window, operand 0, single buffered']
    #allocation3 [shape = 's32[1]{0}', space=sflag, size = 0x4, scoped, tag = 'scoped memory for tpu_custom_call.1']
    #allocation4 [shape = 's32[1]{0}', space=sflag, size = 0x4, scoped, tag = 'scoped memory for tpu_custom_call.1']
    #allocation5 [shape = 'u8[4096]{0}', space=vmem, size = 0x1000, scoped, tag = 'input window, operand 1, single buffered']
    #allocation6 [shape = 's32[1]{0}', space=sflag, size = 0x4, scoped, tag = 'scoped memory for tpu_custom_call.1']
    #allocation7 [shape = 'u8[4096]{0}', space=vmem, size = 0x1000, scoped, tag = 'input window, operand 2, single buffered']
    #allocation8 [shape = 'u8[49152]{0}', space=vmem, size = 0xc000, scoped, tag = 'output window, operand 0, single buffered']
    %8 = vsyncpa [#allocation3], 0
    %9 = vsyncpa [#allocation6], 0
    %10 = vsyncpa [#allocation4], 0
    // Predicated region
    $region2: #{tpu_custom_call.1} parent=1 // pred_check
      _
    $region3: #{tpu_custom_call.1} parent=1 // pred_check_branch
      %12 = sbr.rel (0) target = $region5
    $region4: #{tpu_custom_call.1} parent=1 // pred_region
      %s13 = sadd.s32 0, 0
      %p14 = scmp.lt.s32.totalorder %s13, 0
      %s15 = scalar_select %p14, %s13, 0
      %s17 = ssub.s32 128, 128
      %18 = vsyncadd [#allocation3], %s17
      %s19 = smul.addr %s15, 128
      %s20 = scalar_lea.hbm %s0, %s19
      %s22 = sshll.u32 [#allocation2], 4
      %s23 = int_to_ptr.vmem [resolvable:$true] %s22
      %25 = dma.hbm_to_vmem [thread:$0]  %s20, 128, %s23, [#allocation3]
    $region5: #{tpu_custom_call.1} parent=1 // pred_fallthru
      _
    // Predicated region
    $region6: #{tpu_custom_call.1} parent=1 // pred_check
      _
    $region7: #{tpu_custom_call.1} parent=1 // pred_check_branch
      %27 = sbr.rel (0) target = $region9
    $region8: #{tpu_custom_call.1} parent=1 // pred_region
      %s28 = sadd.s32 0, 0
      %p29 = scmp.lt.s32.totalorder %s28, 0
      %s30 = scalar_select %p29, %s28, 0
      %s32 = ssub.s32 128, 128
      %33 = vsyncadd [#allocation6], %s32
      %s34 = smul.addr %s30, 128
      %s35 = scalar_lea.hbm %s1, %s34
      %s37 = sshll.u32 [#allocation5], 4
      %s38 = int_to_ptr.vmem [resolvable:$true] %s37
      %40 = dma.hbm_to_vmem [thread:$0]  %s35, 128, %s38, [#allocation6]
    $region9: #{tpu_custom_call.1} parent=1 // pred_fallthru
      _
    // Predicated region
    $region10: #{tpu_custom_call.1} parent=1 // pred_check
      _
    $region11: #{tpu_custom_call.1} parent=1 // pred_check_branch
      %42 = sbr.rel (0) target = $region13
    $region12: #{tpu_custom_call.1} parent=1 // pred_region
      %s43 = sadd.s32 0, 0
      %p44 = scmp.lt.s32.totalorder %s43, 0
      %s45 = scalar_select %p44, %s43, 0
      %s47 = ssub.s32 128, 128
      %48 = vsyncadd [#allocation6], %s47
      %s49 = smul.addr %s45, 128
      %s50 = scalar_lea.hbm %s2, %s49
      %s52 = sshll.u32 [#allocation7], 4
      %s53 = int_to_ptr.vmem [resolvable:$true] %s52
      %55 = dma.hbm_to_vmem [thread:$0]  %s50, 128, %s53, [#allocation6]
    $region13: #{tpu_custom_call.1} parent=1 // pred_fallthru
      _
    // Predicated region
    $region14: #{tpu_custom_call.1} parent=1 // pred_check
      _
    $region15: #{tpu_custom_call.1} parent=1 // pred_check_branch
      %57 = sbr.rel (0) target = $region17
    $region16: #{tpu_custom_call.1} parent=1 // pred_region
      %58 = dma.done [#allocation3], 128
    $region17: #{tpu_custom_call.1} parent=1 // pred_fallthru
      _
    // Predicated region
    $region18: #{tpu_custom_call.1} parent=1 // pred_check
      _
    $region19: #{tpu_custom_call.1} parent=1 // pred_check_branch
      %60 = sbr.rel (0) target = $region21
    $region20: #{tpu_custom_call.1} parent=1 // pred_region
      %61 = dma.done [#allocation6], 128
    $region21: #{tpu_custom_call.1} parent=1 // pred_fallthru
      _
    // Predicated region
    $region22: #{tpu_custom_call.1} parent=1 // pred_check
      _
    $region23: #{tpu_custom_call.1} parent=1 // pred_check_branch
      %63 = sbr.rel (0) target = $region25
    $region24: #{tpu_custom_call.1} parent=1 // pred_region
      %64 = dma.done [#allocation6], 128
    $region25: #{tpu_custom_call.1} parent=1 // pred_fallthru
      _
    %s65 = sadd.s32 0, 0
    %p66 = scmp.lt.s32.totalorder %s65, 0
    %s67 = scalar_select %p66, %s65, 0
    %s68 = sadd.s32 0, 0
    %p69 = scmp.lt.s32.totalorder %s68, 0
    %s70 = scalar_select %p69, %s68, 0
    %s71 = sadd.s32 0, 0
    %p72 = scmp.lt.s32.totalorder %s71, 0
    %s73 = scalar_select %p72, %s71, 0
    %p74 = scmp.eq.s32.totalorder 0, 0
    // Predicated region
    $region26: #{tpu_custom_call.1} parent=1 // pred_check
      %p75 = pneg %p74
    $region27: #{tpu_custom_call.1} parent=1 // pred_check_branch
      %77 = sbr.rel (%p75) target = $region29
    $region28: #{tpu_custom_call.1} parent=1 // pred_region
      %78 = vst [vmem:[#allocation8] sm:$0xff] 0.0
      %79 = vst [vmem:[#allocation8 + $0x8] sm:$0xff] 0.0
      %80 = vst [vmem:[#allocation8 + $0x10] sm:$0xff] 0.0
      %81 = vst [vmem:[#allocation8 + $0x18] sm:$0xff] 0.0
      %82 = vst [vmem:[#allocation8 + $0x20] sm:$0xff] 0.0
      %83 = vst [vmem:[#allocation8 + $0x28] sm:$0xff] 0.0
      %84 = vst [vmem:[#allocation8 + $0x30] sm:$0xff] 0.0
      %85 = vst [vmem:[#allocation8 + $0x38] sm:$0xff] 0.0
      %86 = vst [vmem:[#allocation8 + $0x40] sm:$0xff] 0.0
      %87 = vst [vmem:[#allocation8 + $0x48] sm:$0xff] 0.0
      %88 = vst [vmem:[#allocation8 + $0x50] sm:$0xff] 0.0
      %89 = vst [vmem:[#allocation8 + $0x58] sm:$0xff] 0.0
    $region29: #{tpu_custom_call.1} parent=1 // pred_fallthru
      _
    %s90 = sadd.s32 0, 0
    %s91 = smul.u32 %s90, 1024
    %p92 = scmp.lt.s32.totalorder %s91, 200
    %s93 = sadd.s32 %s91, 1024
    %p94 = scmp.le.s32.totalorder %s93, 200
    %p95 = pnand %p92, %p94
    %p96 = pneg %p95
    // Predicated region
    $region30: #{tpu_custom_call.1} parent=1 // pred_check
      _
    $region31: #{tpu_custom_call.1} parent=1 // pred_check_branch
      %98 = sbr.rel (%p95) target = $region33
    $region32: #{tpu_custom_call.1} parent=1 // pred_region
      %v99 = vld [vmem:[#allocation2] sm:$0xff]
      %v100 = vld [vmem:[#allocation7] sm:$0xff]
      %v101 = vcvt.s32.f32 %v100
      %v102 = vld [vmem:[#allocation5] sm:$0xff]
      %v103 = vmin.f32 %v99, 0.0
      %v104 = vand.u32 2147483647, %v99
      %v105 = vsub.f32 0.0, %v104
      %v106 = vmul.f32 %v105, 1.442695
      %v107 = vpow.pop %v106
      %v108 = vadd.f32 %v107, 1.0
      %v109 = vlog2.pop %v108
      %v110 = vmul.f32 %v109, 0.6931472
      %v111 = vsub.f32 %v103, %v110
      %v112 = vmul.f32 %v111, %v101
      %v113 = vmul.f32 %v111, %v111
      %v114 = vmul.f32 %v101, %v101
      %v115 = vadd.f32 %v111, 0.0
      %v116 = vadd.f32 %v101, 0.0
      %v117 = vadd.f32 %v112, 0.0
      %v118 = vadd.f32 %v113, 0.0
      %v119 = vadd.f32 %v114, 0.0
      %vm120 = vcmp.eq.s32.totalorder %v102, 1
      %v121 = vsel %vm120, 1, 0
      %v122 = vcvt.s32.f32 %v121
      %v123 = vadd.f32 %v122, 0.0
      %v124 = vmul.f32 %v122, %v111
      %v125 = vadd.f32 %v124, 0.0
      %v126 = vmul.f32 %v122, %v101
      %v127 = vadd.f32 %v126, 0.0
      %v128 = vmul.f32 %v122, %v112
      %v129 = vadd.f32 %v128, 0.0
      %v130 = vmul.f32 %v122, %v113
      %v131 = vadd.f32 %v130, 0.0
      %v132 = vmul.f32 %v122, %v114
      %v133 = vadd.f32 %v132, 0.0
      %v134 = vld [vmem:[#allocation8] sm:$0xff]
      %v135 = vadd.f32 %v134, 1.0
      %136 = vst [vmem:[#allocation8] sm:$0xff] %v135
      %v137 = vld [vmem:[#allocation8 + $0x8] sm:$0xff]
      %v138 = vadd.f32 %v137, %v115
      %139 = vst [vmem:[#allocation8 + $0x8] sm:$0xff] %v138
      %v140 = vld [vmem:[#allocation8 + $0x10] sm:$0xff]
      %v141 = vadd.f32 %v140, %v116
      %142 = vst [vmem:[#allocation8 + $0x10] sm:$0xff] %v141
      %v143 = vld [vmem:[#allocation8 + $0x18] sm:$0xff]
      %v144 = vadd.f32 %v143, %v117
      %145 = vst [vmem:[#allocation8 + $0x18] sm:$0xff] %v144
      %v146 = vld [vmem:[#allocation8 + $0x20] sm:$0xff]
      %v147 = vadd.f32 %v146, %v118
      %148 = vst [vmem:[#allocation8 + $0x20] sm:$0xff] %v147
      %v149 = vld [vmem:[#allocation8 + $0x28] sm:$0xff]
      %v150 = vadd.f32 %v149, %v119
      %151 = vst [vmem:[#allocation8 + $0x28] sm:$0xff] %v150
      %v152 = vld [vmem:[#allocation8 + $0x30] sm:$0xff]
      %v153 = vadd.f32 %v152, %v123
      %154 = vst [vmem:[#allocation8 + $0x30] sm:$0xff] %v153
      %v155 = vld [vmem:[#allocation8 + $0x38] sm:$0xff]
      %v156 = vadd.f32 %v155, %v125
      %157 = vst [vmem:[#allocation8 + $0x38] sm:$0xff] %v156
      %v158 = vld [vmem:[#allocation8 + $0x40] sm:$0xff]
      %v159 = vadd.f32 %v158, %v127
      %160 = vst [vmem:[#allocation8 + $0x40] sm:$0xff] %v159
      %v161 = vld [vmem:[#allocation8 + $0x48] sm:$0xff]
      %v162 = vadd.f32 %v161, %v129
      %163 = vst [vmem:[#allocation8 + $0x48] sm:$0xff] %v162
      %v164 = vld [vmem:[#allocation8 + $0x50] sm:$0xff]
      %v165 = vadd.f32 %v164, %v131
      %166 = vst [vmem:[#allocation8 + $0x50] sm:$0xff] %v165
      %v167 = vld [vmem:[#allocation8 + $0x58] sm:$0xff]
      %v168 = vadd.f32 %v167, %v133
      %169 = vst [vmem:[#allocation8 + $0x58] sm:$0xff] %v168
    $region33: #{tpu_custom_call.1} parent=1 // pred_fallthru
      _
    %p170 = scmp.gt.s32.totalorder %s93, 200
    %p171 = pnand %p92, %p170
    %p172 = pneg %p171
    // Predicated region
    $region34: #{tpu_custom_call.1} parent=1 // pred_check
      _
    $region35: #{tpu_custom_call.1} parent=1 // pred_check_branch
      %174 = sbr.rel (%p171) target = $region37
    $region36: #{tpu_custom_call.1} parent=1 // pred_region
      %v175 = vld [vmem:[#allocation2] sm:$0xff]
      %v176 = vld [vmem:[#allocation7] sm:$0xff]
      %v177 = vcvt.s32.f32 %v176
      %v178 = vld [vmem:[#allocation5] sm:$0xff]
      %v179 = vlaneseq
      %v180 = vshrl.u32 %v179, 7
      %v181 = vlaneseq
      %v182 = vand.u32 %v181, 127
      %v183 = vmul.u32 %v180, 128
      %v184 = vstv %s91
      %v185 = vadd.s32 %v184, %v183
      %v186 = vadd.s32 %v185, %v182
      %vm187 = vcmp.lt.s32.totalorder %v186, 200
      %v188 = vsel %vm187, 1, 0
      %v189 = vcvt.s32.f32 %v188
      %v190 = vsel %vm187, %v175, 0.0
      %v191 = vsel %vm187, %v177, 0.0
      %v192 = vmin.f32 %v190, 0.0
      %v193 = vand.u32 2147483647, %v190
      %v194 = vsub.f32 0.0, %v193
      %v195 = vmul.f32 %v194, 1.442695
      %v196 = vpow.pop %v195
      %v197 = vadd.f32 %v196, 1.0
      %v198 = vlog2.pop %v197
      %v199 = vmul.f32 %v198, 0.6931472
      %v200 = vsub.f32 %v192, %v199
      %v201 = vmul.f32 %v200, %v191
      %v202 = vmul.f32 %v200, %v200
      %v203 = vmul.f32 %v191, %v191
      %v204 = vadd.f32 %v189, 0.0
      %v205 = vmul.f32 %v189, %v200
      %v206 = vadd.f32 %v205, 0.0
      %v207 = vadd.f32 %v191, 0.0
      %v208 = vadd.f32 %v201, 0.0
      %v209 = vmul.f32 %v189, %v202
      %v210 = vadd.f32 %v209, 0.0
      %v211 = vadd.f32 %v203, 0.0
      %vm212 = vcmp.eq.s32.totalorder %v178, 1
      %v213 = vsel %vm212, 1, 0
      %v214 = vcvt.s32.f32 %v213
      %v215 = vmul.f32 %v214, %v189
      %v216 = vadd.f32 %v215, 0.0
      %v217 = vmul.f32 %v215, %v200
      %v218 = vadd.f32 %v217, 0.0
      %v219 = vmul.f32 %v215, %v191
      %v220 = vadd.f32 %v219, 0.0
      %v221 = vmul.f32 %v215, %v201
      %v222 = vadd.f32 %v221, 0.0
      %v223 = vmul.f32 %v215, %v202
      %v224 = vadd.f32 %v223, 0.0
      %v225 = vmul.f32 %v215, %v203
      %v226 = vadd.f32 %v225, 0.0
      %v227 = vld [vmem:[#allocation8] sm:$0xff]
      %v228 = vadd.f32 %v227, %v204
      %229 = vst [vmem:[#allocation8] sm:$0xff] %v228
      %v230 = vld [vmem:[#allocation8 + $0x8] sm:$0xff]
      %v231 = vadd.f32 %v230, %v206
      %232 = vst [vmem:[#allocation8 + $0x8] sm:$0xff] %v231
      %v233 = vld [vmem:[#allocation8 + $0x10] sm:$0xff]
      %v234 = vadd.f32 %v233, %v207
      %235 = vst [vmem:[#allocation8 + $0x10] sm:$0xff] %v234
      %v236 = vld [vmem:[#allocation8 + $0x18] sm:$0xff]
      %v237 = vadd.f32 %v236, %v208
      %238 = vst [vmem:[#allocation8 + $0x18] sm:$0xff] %v237
      %v239 = vld [vmem:[#allocation8 + $0x20] sm:$0xff]
      %v240 = vadd.f32 %v239, %v210
      %241 = vst [vmem:[#allocation8 + $0x20] sm:$0xff] %v240
      %v242 = vld [vmem:[#allocation8 + $0x28] sm:$0xff]
      %v243 = vadd.f32 %v242, %v211
      %244 = vst [vmem:[#allocation8 + $0x28] sm:$0xff] %v243
      %v245 = vld [vmem:[#allocation8 + $0x30] sm:$0xff]
      %v246 = vadd.f32 %v245, %v216
      %247 = vst [vmem:[#allocation8 + $0x30] sm:$0xff] %v246
      %v248 = vld [vmem:[#allocation8 + $0x38] sm:$0xff]
      %v249 = vadd.f32 %v248, %v218
      %250 = vst [vmem:[#allocation8 + $0x38] sm:$0xff] %v249
      %v251 = vld [vmem:[#allocation8 + $0x40] sm:$0xff]
      %v252 = vadd.f32 %v251, %v220
      %253 = vst [vmem:[#allocation8 + $0x40] sm:$0xff] %v252
      %v254 = vld [vmem:[#allocation8 + $0x48] sm:$0xff]
      %v255 = vadd.f32 %v254, %v222
      %256 = vst [vmem:[#allocation8 + $0x48] sm:$0xff] %v255
      %v257 = vld [vmem:[#allocation8 + $0x50] sm:$0xff]
      %v258 = vadd.f32 %v257, %v224
      %259 = vst [vmem:[#allocation8 + $0x50] sm:$0xff] %v258
      %v260 = vld [vmem:[#allocation8 + $0x58] sm:$0xff]
      %v261 = vadd.f32 %v260, %v226
      %262 = vst [vmem:[#allocation8 + $0x58] sm:$0xff] %v261
    $region37: #{tpu_custom_call.1} parent=1 // pred_fallthru
      _
    // Predicated region
    $region38: #{tpu_custom_call.1} parent=1 // pred_check
      _
    $region39: #{tpu_custom_call.1} parent=1 // pred_check_branch
      %264 = sbr.rel (0) target = $region41
    $region40: #{tpu_custom_call.1} parent=1 // pred_region
      %s266 = ssub.s32 1536, 1536
      %267 = vsyncadd [#allocation4], %s266
      %s268 = sshll.u32 [#allocation8], 4
      %s269 = int_to_ptr.vmem [resolvable:$true] %s268
      %274 = dma.vmem_to_hbm [thread:$0]  %s269, 1536, %s3, [#allocation4], 128, 128, 8
    $region41: #{tpu_custom_call.1} parent=1 // pred_fallthru
      _
    // Predicated region
    $region42: #{tpu_custom_call.1} parent=1 // pred_check
      _
    $region43: #{tpu_custom_call.1} parent=1 // pred_check_branch
      %276 = sbr.rel (0) target = $region45
    $region44: #{tpu_custom_call.1} parent=1 // pred_region
      %277 = dma.done [#allocation4], 1536
    $region45: #{tpu_custom_call.1} parent=1 // pred_fallthru
      _
    %278 = vsyncpa [#allocation3], 1
    %279 = vsyncpa [#allocation6], 1
    %280 = vsyncpa [#allocation4], 1

</llo_original>
